<compile_context>
chip_gen: v7x
topology: tpu7x:2x2x1
jax: 0.10.0
libtpu: 0.0.40
codegen_flags: <defaults>
</compile_context>

<pallas_src>
import math
import jax
import jax.numpy as jnp
from jax import lax
from jax.experimental import pallas as pl
from jax.experimental.pallas import tpu as pltpu

_MIB = 1024 * 1024


def _gelu_exact(x):
    # PyTorch nn.GELU() default = exact (erf-based) GELU; computed in f32.
    # (tanh-approx GELU would move this to the EUP slot but changes numerics.)
    return 0.5 * x * (1.0 + lax.erf(x * (1.0 / math.sqrt(2.0))))


# ----------------------------------------------------------------------------
# Kernels
# ----------------------------------------------------------------------------
def ffn_streamed_kernel(x_ref, w1_ref, b1_ref, w2_ref, b2_ref, o_ref, acc_ref):
    # x_ref:  (tm, d_model)   VMEM, native dtype
    # w1_ref: (d_model, th)   contiguous W1 slab (leading packed dim squeezed)
    # b1_ref: (1, th)
    # w2_ref: (th, d_model)   W2 slab
    # b2_ref: (1, d_model)
    # o_ref:  (tm, d_model)
    # acc_ref:(tm, d_model)   f32 scratch accumulator
    j = pl.program_id(1)

    @pl.when(j == 0)
    def _():
        acc_ref[...] = jnp.zeros_like(acc_ref)

    # First matmul: cast LHS to the weight dtype so the MXU runs at native
    # (e.g. bf16) rate; accumulate in f32.
    h = jnp.dot(x_ref[...].astype(w1_ref.dtype), w1_ref[...],
                preferred_element_type=jnp.float32)
    h = h + b1_ref[...].astype(jnp.float32)
    h = _gelu_exact(h)

    # Second matmul: activation slab cast back to the weight dtype, f32 acc.
    acc_ref[...] += jnp.dot(h.astype(w2_ref.dtype), w2_ref[...],
                            preferred_element_type=jnp.float32)

    @pl.when(j == pl.num_programs(1) - 1)
    def _():
        y = acc_ref[...] + b2_ref[...].astype(jnp.float32)
        # TODO(synk): dropout omitted (inference / eval mode => identity).
        o_ref[...] = y.astype(o_ref.dtype)


def ffn_resident_kernel(x_ref, w1_ref, b1_ref, w2_ref, b2_ref, o_ref):
    # Full W1/W2 VMEM-resident; single pass per row tile, no accumulator.
    h = jnp.dot(x_ref[...].astype(w1_ref.dtype), w1_ref[...],
                preferred_element_type=jnp.float32)
    h = h + b1_ref[...].astype(jnp.float32)
    h = _gelu_exact(h)
    y = jnp.dot(h.astype(w2_ref.dtype), w2_ref[...],
                preferred_element_type=jnp.float32)
    y = y + b2_ref[...].astype(jnp.float32)
    # TODO(synk): dropout omitted (inference / eval mode => identity).
    o_ref[...] = y.astype(o_ref.dtype)


# ----------------------------------------------------------------------------
# Wrapper
# ----------------------------------------------------------------------------
def _vmem_capacity_bytes():
    try:
        return int(pltpu.get_tpu_info().vmem_capacity_bytes)
    except Exception:
        return 64 * _MIB  # conservative (v7x-sized) fallback


def _round_up(x, m):
    return ((x + m - 1) // m) * m


def _pick_hidden_tile(hidden, cap):
    for th in (1024, 512, 256, 128):
        if th <= cap and hidden % th == 0:
            return th
    return hidden  # tiny / odd hidden: use the full dim (legal full-extent block)


def feed_forward(x, w1, b1, w2, b2, *, tm=None, th=None, force_streamed=False):
    """x: (..., d_model). Weights stored as (in, out) (transpose of nn.Linear.weight).
    Returns same shape/dtype as x. Pass bf16 weights for best MXU throughput."""
    orig_shape = x.shape
    d_model = orig_shape[-1]
    hidden = w1.shape[1]
    x2d = x.reshape(-1, d_model)
    M = x2d.shape[0]

    x_isz = jnp.dtype(x.dtype).itemsize
    w_isz = jnp.dtype(w1.dtype).itemsize
    o_isz = x_isz

    # Generation-aware VMEM budget (128 MiB v5e/v6e vs 64 MiB v7x).
    vmem_cap = _vmem_capacity_bytes()
    big_vmem = vmem_cap >= 100 * _MIB
    budget = int(0.78 * vmem_cap)
    headroom = 2 * _MIB  # Mosaic internal scratch

    weight_bytes = 2 * d_model * hidden * w_isz
    resident = (not force_streamed) and (weight_bytes <= budget // 4)

    auto_th = th is None
    auto_tm = tm is None
    if auto_th:
        th = _pick_hidden_tile(hidden, 1024 if big_vmem else 512)
    assert hidden % th == 0

    # Working-set estimates (double-buffered pipelined operands + scratch).
    def streamed_bytes(tm_, th_):
        return (2 * tm_ * d_model * x_isz            # x tile (double buffered)
                + 2 * tm_ * d_model * o_isz          # out tile
                + tm_ * d_model * 4                  # f32 accumulator scratch
                + 2 * d_model * th_ * w_isz          # W1 slab
                + 2 * th_ * d_model * w_isz          # W2 slab
                + 2 * th_ * w_isz + 2 * d_model * w_isz
                + tm_ * th_ * (4 + w_isz)            # intermediate activation
                + headroom)

    def resident_bytes(tm_):
        return (weight_bytes + (hidden + d_model) * w_isz
                + 2 * tm_ * d_model * x_isz
                + 2 * tm_ * d_model * o_isz
                + tm_ * hidden * (4 + w_isz)         # intermediate activation
                + headroom)

    def working_set_bytes(tm_, th_):
        return resident_bytes(tm_) if resident else streamed_bytes(tm_, th_)

    if auto_tm:
        # Big row tiles so W1/W2 re-streaming (streamed path) is amortized past
        # the HBM roofline; smaller default on 64-MiB-VMEM parts.
        tm = 1024 if big_vmem else 512
        tm = min(tm, _round_up(M, 8))

    # Shrink tiles (th first, then tm) until the working set fits VMEM.
    while working_set_bytes(tm, th) > budget:
        if auto_th and (not resident) and th > 128 and hidden % (th // 2) == 0:
            th //= 2
        elif auto_tm and tm > 128:
            tm = max(128, _round_up(tm // 2, 8))
        else:
            break

    # Small-VMEM parts (v7x class) have 2 TensorCores: keep >=2 row tiles so the
    # "parallel" M axis actually shards across both cores.
    if auto_tm and (not big_vmem) and M > 256 and pl.cdiv(M, tm) < 2:
        tm = max(128, _round_up(pl.cdiv(M, 2), 8))

    n_j = hidden // th
    grid_m = pl.cdiv(M, tm)
    Mp = grid_m * tm
    if Mp != M:
        x2d = jnp.pad(x2d, ((0, Mp - M), (0, 0)))

    b1_2d = b1.reshape(1, hidden)
    b2_2d = b2.reshape(1, d_model)

    used = working_set_bytes(tm, th)
    vmem_limit = int(min(max(int(1.25 * used), 32 * _MIB), int(0.85 * vmem_cap)))

    # Honest cost estimate: weights are re-streamed once per row tile on the
    # streamed path.
    wt_traffic = weight_bytes + (hidden + d_model) * w_isz
    if not resident:
        wt_traffic *= grid_m
    cost = pl.CostEstimate(
        flops=4 * Mp * d_model * hidden,
        transcendentals=Mp * hidden,
        bytes_accessed=int(Mp * d_model * (x_isz + o_isz) + wt_traffic),
    )

    if resident:
        grid_spec = pltpu.PrefetchScalarGridSpec(
            num_scalar_prefetch=0,
            grid=(grid_m,),
            in_specs=[
                pl.BlockSpec((tm, d_model), lambda i: (i, 0)),      # x tile
                pl.BlockSpec((d_model, hidden), lambda i: (0, 0)),  # W1 (resident)
                pl.BlockSpec((1, hidden), lambda i: (0, 0)),        # b1
                pl.BlockSpec((hidden, d_model), lambda i: (0, 0)),  # W2 (resident)
                pl.BlockSpec((1, d_model), lambda i: (0, 0)),       # b2
            ],
            out_specs=pl.BlockSpec((tm, d_model), lambda i: (i, 0)),
        )
        out = pl.pallas_call(
            ffn_resident_kernel,
            out_shape=jax.ShapeDtypeStruct((Mp, d_model), x.dtype),
            grid_spec=grid_spec,
            compiler_params=pltpu.CompilerParams(
                dimension_semantics=("parallel",),
                vmem_limit_bytes=vmem_limit,
            ),
            cost_estimate=cost,
        )(x2d, w1, b1_2d, w2, b2_2d)
    else:
        # Pre-pack W1 so each hidden slab is one contiguous HBM block.
        # TODO(synk): in production, do this packing once at weight-load time.
        w1_packed = w1.reshape(d_model, n_j, th).transpose(1, 0, 2)  # (n_j, d_model, th)

        grid_spec = pltpu.PrefetchScalarGridSpec(
            num_scalar_prefetch=0,
            grid=(grid_m, n_j),
            in_specs=[
                pl.BlockSpec((tm, d_model), lambda i, j: (i, 0)),          # x tile
                pl.BlockSpec((None, d_model, th), lambda i, j: (j, 0, 0)),  # W1 slab (contiguous)
                pl.BlockSpec((1, th), lambda i, j: (0, j)),                 # b1 slab
                pl.BlockSpec((th, d_model), lambda i, j: (j, 0)),           # W2 slab
                pl.BlockSpec((1, d_model), lambda i, j: (0, 0)),            # b2
            ],
            out_specs=pl.BlockSpec((tm, d_model), lambda i, j: (i, 0)),
            scratch_shapes=[pltpu.VMEM((tm, d_model), jnp.float32)],
        )
        out = pl.pallas_call(
            ffn_streamed_kernel,
            out_shape=jax.ShapeDtypeStruct((Mp, d_model), x.dtype),
            grid_spec=grid_spec,
            compiler_params=pltpu.CompilerParams(
                dimension_semantics=("parallel", "arbitrary"),
                vmem_limit_bytes=vmem_limit,
            ),
            cost_estimate=cost,
        )(x2d, w1_packed, b1_2d, w2, b2_2d)

    if Mp != M:
        out = out[:M]
    return out.reshape(orig_shape)


def init_params(key, d_model, dtype=jnp.float32):
    """Deterministic init matching nn.Linear shapes (stored transposed: (in, out))."""
    hidden = 4 * d_model
    k1, k2, k3, k4 = jax.random.split(key, 4)
    bound1 = 1.0 / math.sqrt(d_model)
    bound2 = 1.0 / math.sqrt(hidden)
    w1 = jax.random.uniform(k1, (d_model, hidden), jnp.float32, -bound1, bound1).astype(dtype)
    b1 = jax.random.uniform(k2, (hidden,), jnp.float32, -bound1, bound1).astype(dtype)
    w2 = jax.random.uniform(k3, (hidden, d_model), jnp.float32, -bound2, bound2).astype(dtype)
    b2 = jax.random.uniform(k4, (d_model,), jnp.float32, -bound2, bound2).astype(dtype)
    return w1, b1, w2, b2


if __name__ == "__main__":
    def reference(x, w1, b1, w2, b2):
        h = x.astype(jnp.float32) @ w1.astype(jnp.float32) + b1.astype(jnp.float32)
        h = 0.5 * h * (1.0 + lax.erf(h / math.sqrt(2.0)))
        return h @ w2.astype(jnp.float32) + b2.astype(jnp.float32)

    # Test 1: small model -> resident-weights fast path.
    batch, seq, d_model = 2, 8, 32
    key = jax.random.PRNGKey(0)
    kx, kp = jax.random.split(key)
    x = jax.random.normal(kx, (batch, seq, d_model), jnp.float32)
    w1, b1, w2, b2 = init_params(kp, d_model)
    y = jax.block_until_ready(feed_forward(x, w1, b1, w2, b2))
    y_ref = reference(x, w1, b1, w2, b2).astype(x.dtype)
    assert y.shape == x.shape
    assert jnp.allclose(y, y_ref, atol=1e-4, rtol=1e-4)

    # Test 2: force the streamed (hidden-slab accumulation) path.
    d_model2 = 64
    kx2, kp2 = jax.random.split(jax.random.PRNGKey(1))
    x2 = jax.random.normal(kx2, (batch, seq, d_model2), jnp.float32)
    w1b, b1b, w2b, b2b = init_params(kp2, d_model2)
    y2 = jax.block_until_ready(
        feed_forward(x2, w1b, b1b, w2b, b2b, th=128, force_streamed=True))
    y2_ref = reference(x2, w1b, b1b, w2b, b2b).astype(x2.dtype)
    assert y2.shape == x2.shape
    assert jnp.allclose(y2, y2_ref, atol=2e-3, rtol=2e-3)

    print("KERNEL_OK")
</pallas_src>

<mosaic_0001>
module attributes {stable_mosaic.version = 11 : i64} {
  func.func @ffn_resident_kernel(%arg0: i32, %arg1: memref<16x32xf32, #tpu.memory_space<vmem>>, %arg2: memref<32x128xf32, #tpu.memory_space<vmem>>, %arg3: memref<1x128xf32, #tpu.memory_space<vmem>>, %arg4: memref<128x32xf32, #tpu.memory_space<vmem>>, %arg5: memref<1x32xf32, #tpu.memory_space<vmem>>, %arg6: memref<16x32xf32, #tpu.memory_space<vmem>>) attributes {dimension_semantics = [#tpu.dimension_semantics<parallel>], iteration_bounds = array<i64: 1>, scalar_prefetch = 0 : i64, scratch_operands = 0 : i64, tpu.core_type = #tpu.core_type<tc>, window_params = [{transform_indices = @transform_0, window_bounds = array<i64: 16, 32>}, {pipeline_mode = #tpu.pipeline_mode<synchronous>, transform_indices = @transform_1, window_bounds = array<i64: 32, 128>}, {pipeline_mode = #tpu.pipeline_mode<synchronous>, transform_indices = @transform_2, window_bounds = array<i64: 1, 128>}, {pipeline_mode = #tpu.pipeline_mode<synchronous>, transform_indices = @transform_3, window_bounds = array<i64: 128, 32>}, {pipeline_mode = #tpu.pipeline_mode<synchronous>, transform_indices = @transform_4, window_bounds = array<i64: 1, 32>}, {transform_indices = @transform_5, window_bounds = array<i64: 16, 32>}]} {
    %c0 = arith.constant 0 : index
    %c0_0 = arith.constant 0 : index
    %0 = vector.load %arg1[%c0, %c0_0] : memref<16x32xf32, #tpu.memory_space<vmem>>, vector<16x32xf32>
    %c0_1 = arith.constant 0 : index
    %c0_2 = arith.constant 0 : index
    %1 = vector.load %arg2[%c0_1, %c0_2] : memref<32x128xf32, #tpu.memory_space<vmem>>, vector<32x128xf32>
    %cst = arith.constant dense<0.000000e+00> : vector<16x128xf32>
    %2 = tpu.matmul %0, %1, %cst {dimension_numbers = #tpu.dot_dimension_numbers<[1], [0], [0], [1], [0, 0, 1, 1], [], []>} : vector<16x32xf32>, vector<32x128xf32>, vector<16x128xf32> -> vector<16x128xf32>
    %c0_3 = arith.constant 0 : index
    %c0_4 = arith.constant 0 : index
    %3 = vector.load %arg3[%c0_3, %c0_4] : memref<1x128xf32, #tpu.memory_space<vmem>>, vector<1x128xf32>
    %4 = vector.broadcast %3 : vector<1x128xf32> to vector<16x128xf32>
    %5 = arith.addf %2, %4 : vector<16x128xf32>
    %cst_5 = arith.constant 5.000000e-01 : f32
    %6 = vector.broadcast %cst_5 : f32 to vector<16x128xf32>
    %7 = arith.mulf %6, %5 : vector<16x128xf32>
    %cst_6 = arith.constant 0.707106769 : f32
    %8 = vector.broadcast %cst_6 : f32 to vector<16x128xf32>
    %9 = arith.mulf %5, %8 : vector<16x128xf32>
    %10 = math.erf %9 : vector<16x128xf32>
    %cst_7 = arith.constant 1.000000e+00 : f32
    %11 = vector.broadcast %cst_7 : f32 to vector<16x128xf32>
    %12 = arith.addf %11, %10 : vector<16x128xf32>
    %13 = arith.mulf %7, %12 : vector<16x128xf32>
    %c0_8 = arith.constant 0 : index
    %c0_9 = arith.constant 0 : index
    %14 = vector.load %arg4[%c0_8, %c0_9] : memref<128x32xf32, #tpu.memory_space<vmem>>, vector<128x32xf32>
    %cst_10 = arith.constant dense<0.000000e+00> : vector<16x32xf32>
    %15 = tpu.matmul %13, %14, %cst_10 {dimension_numbers = #tpu.dot_dimension_numbers<[1], [0], [0], [1], [0, 0, 1, 1], [], []>} : vector<16x128xf32>, vector<128x32xf32>, vector<16x32xf32> -> vector<16x32xf32>
    %c0_11 = arith.constant 0 : index
    %c0_12 = arith.constant 0 : index
    %16 = vector.load %arg5[%c0_11, %c0_12] : memref<1x32xf32, #tpu.memory_space<vmem>>, vector<1x32xf32>
    %17 = vector.broadcast %16 : vector<1x32xf32> to vector<16x32xf32>
    %18 = arith.addf %15, %17 : vector<16x32xf32>
    %c0_13 = arith.constant 0 : index
    %c0_14 = arith.constant 0 : index
    %19 = vector.load %arg6[%c0_13, %c0_14] : memref<16x32xf32, #tpu.memory_space<vmem>>, vector<16x32xf32>
    tpu.vector_store %arg6[%c0_13, %c0_14], %18 {strides = array<i32>} : memref<16x32xf32, #tpu.memory_space<vmem>>, vector<16x32xf32>,
    return
  }
  func.func @transform_0(%arg0: i32) -> (i32, i32) {
    %c0_i32 = arith.constant 0 : i32
    %c0_i32_0 = arith.constant 0 : i32
    return %arg0, %c0_i32 : i32, i32
  }
  func.func @transform_1(%arg0: i32) -> (i32, i32) {
    %c0_i32 = arith.constant 0 : i32
    %c0_i32_0 = arith.constant 0 : i32
    %c0_i32_1 = arith.constant 0 : i32
    return %c0_i32, %c0_i32_0 : i32, i32
  }
  func.func @transform_2(%arg0: i32) -> (i32, i32) {
    %c0_i32 = arith.constant 0 : i32
    %c0_i32_0 = arith.constant 0 : i32
    %c0_i32_1 = arith.constant 0 : i32
    return %c0_i32, %c0_i32_0 : i32, i32
  }
  func.func @transform_3(%arg0: i32) -> (i32, i32) {
    %c0_i32 = arith.constant 0 : i32
    %c0_i32_0 = arith.constant 0 : i32
    %c0_i32_1 = arith.constant 0 : i32
    return %c0_i32, %c0_i32_0 : i32, i32
  }
  func.func @transform_4(%arg0: i32) -> (i32, i32) {
    %c0_i32 = arith.constant 0 : i32
    %c0_i32_0 = arith.constant 0 : i32
    %c0_i32_1 = arith.constant 0 : i32
    return %c0_i32, %c0_i32_0 : i32, i32
  }
  func.func @transform_5(%arg0: i32) -> (i32, i32) {
    %c0_i32 = arith.constant 0 : i32
    %c0_i32_0 = arith.constant 0 : i32
    return %arg0, %c0_i32 : i32, i32
  }
}

</mosaic_0001>

<llo_original>
// kernel: tpu_custom_call.1
$region0: #{tpu_custom_call.1}
  #allocation0 [shape = 'u32[]', space=smem, size = 0x4, offset = 0x4, fixed_abs, tag = 'smem constant byte address 0x4 - core index']
  #allocation1 [shape = 'u32[144,128]{1,0:T(1,128)}', space=vmem, size = 0x12000, scoped, tag = 'internal scratch']
  %s0 = inlined_call_operand.vmem [shape: f32[16,32], index: 0, kind: input, shape index: {}]
  %s1 = inlined_call_operand.vmem [shape: f32[32,128], index: 1, kind: input, shape index: {}]
  %s2 = inlined_call_operand.vmem [shape: f32[1,128], index: 2, kind: input, shape index: {}]
  %s3 = inlined_call_operand.vmem [shape: f32[128,32], index: 3, kind: input, shape index: {}]
  %s4 = inlined_call_operand.vmem [shape: f32[1,32], index: 4, kind: input, shape index: {}]
  %s5 = inlined_call_operand.hbm [shape: f32[16,32], index: 5, kind: output, shape index: {}]
  %s6 = sld [smem:[#allocation0]]
  $region30: #{tpu_custom_call.1} parent=0
    _
  %s8 = ssub.s32 1, %s6
  %s9 = scalar_select 0, %s8, %s6
  $region1: #{tpu_custom_call.1} parent=0
    #allocation2 [shape = 'u8[8192]{0}', space=vmem, size = 0x2000, scoped, tag = 'output window, operand 0, single buffered']
    #allocation3 [shape = 's32[1]{0}', space=sflag, size = 0x4, scoped, tag = 'scoped memory for tpu_custom_call.1']
    %10 = vsyncpa [#allocation3], 0
    // Predicated region
    $region2: #{tpu_custom_call.1} parent=1 // pred_check
      _
    $region3: #{tpu_custom_call.1} parent=1 // pred_check_branch
      %12 = sbr.rel (0) target = $region5
    $region4: #{tpu_custom_call.1} parent=1 // pred_region
      _
    $region5: #{tpu_custom_call.1} parent=1 // pred_fallthru
      _
    // Predicated region
    $region6: #{tpu_custom_call.1} parent=1 // pred_check
      _
    $region7: #{tpu_custom_call.1} parent=1 // pred_check_branch
      %14 = sbr.rel (0) target = $region9
    $region8: #{tpu_custom_call.1} parent=1 // pred_region
      _
    $region9: #{tpu_custom_call.1} parent=1 // pred_fallthru
      _
    // Predicated region
    $region10: #{tpu_custom_call.1} parent=1 // pred_check
      _
    $region11: #{tpu_custom_call.1} parent=1 // pred_check_branch
      %16 = sbr.rel (0) target = $region13
    $region12: #{tpu_custom_call.1} parent=1 // pred_region
      _
    $region13: #{tpu_custom_call.1} parent=1 // pred_fallthru
      _
    // Predicated region
    $region14: #{tpu_custom_call.1} parent=1 // pred_check
      _
    $region15: #{tpu_custom_call.1} parent=1 // pred_check_branch
      %18 = sbr.rel (0) target = $region17
    $region16: #{tpu_custom_call.1} parent=1 // pred_region
      _
    $region17: #{tpu_custom_call.1} parent=1 // pred_fallthru
      _
    // Predicated region
    $region18: #{tpu_custom_call.1} parent=1 // pred_check
      _
    $region19: #{tpu_custom_call.1} parent=1 // pred_check_branch
      %20 = sbr.rel (0) target = $region21
    $region20: #{tpu_custom_call.1} parent=1 // pred_region
      _
    $region21: #{tpu_custom_call.1} parent=1 // pred_fallthru
      _
    %v21 = vld [vmem:[%s0] sm:$0xff]
    %v22 = vld [vmem:[%s0 + $0x8] sm:$0xff]
    %v23 = vld [vmem:[%s1] sm:$0xff]
    %v24 = vld [vmem:[%s1 + $0x8] sm:$0xff]
    %v25 = vld [vmem:[%s1 + $0x10] sm:$0xff]
    %v26 = vld [vmem:[%s1 + $0x18] sm:$0xff]
    %v27 = vld [vmem:[%s2] sm:$0x1]
    %v29 = vlaneseq
    %v30 = vshrl.u32 %v29, 7
    %v31 = vsub.s32 0, %v30
    %v32 = vrot.slane %v27, %v31
    %vm34 = vcmask 261120
    %v36 = vsel %vm34, %v21, 0
    %v39 = vsel %vm34, %v22, 0
    %41 = vmatprep.subr.mxu0 0.0
    %42 = vmatpush1.msra.mxu0 %v23
    %43 = vmatprep.subr.mxu0 0.0
    %44 = vmatpush1.msra.mxu0 %v24
    %45 = vmatprep.subr.mxu0 0.0
    %46 = vmatpush1.msra.mxu0 %v25
    %47 = vmatprep.subr.mxu0 0.0
    %48 = vmatpush1.msra.mxu0 %v26
    %49 = vmatprep.subr.mxu0 0.0
    %50 = vmatpush1.msra.mxu0 0.0
    %51 = vmatprep.subr.mxu0 0.0
    %52 = vmatpush1.msra.mxu0 0.0
    %53 = vmatprep.subr.mxu0 0.0
    %54 = vmatpush1.msra.mxu0 0.0
    %55 = vmatprep.subr.mxu0 0.0
    %56 = vmatpush1.msra.mxu0 0.0
    %57 = vmatprep.subr.mxu0 0.0
    %58 = vmatpush1.msra.mxu0 0.0
    %59 = vmatprep.subr.mxu0 0.0
    %60 = vmatpush1.msra.mxu0 0.0
    %61 = vmatprep.subr.mxu0 0.0
    %62 = vmatpush1.msra.mxu0 0.0
    %63 = vmatprep.subr.mxu0 0.0
    %64 = vmatpush1.msra.mxu0 0.0
    %65 = vmatprep.subr.mxu0 0.0
    %66 = vmatpush1.msra.mxu0 0.0
    %67 = vmatprep.subr.mxu0 0.0
    %68 = vmatpush1.msra.mxu0 0.0
    %69 = vmatprep.subr.mxu0 0.0
    %70 = vmatpush1.msra.mxu0 0.0
    %71 = vmatprep.subr.mxu0 0.0
    %72 = vmatpush1.msra.mxu0 0.0
    %73 = vmatprep.subr.mxu0 0.0
    %74 = vmatpush1.msra.mxu0 0.0
    %75 = vmatprep.subr.mxu0 0.0
    %76 = vmatpush1.msra.mxu0 0.0
    %77 = vmatprep.subr.mxu0 0.0
    %78 = vmatpush1.msra.mxu0 0.0
    %79 = vmatprep.subr.mxu0 0.0
    %80 = vmatpush1.msra.mxu0 0.0
    %81 = vmatprep.subr.mxu0 0.0
    %82 = vmatpush1.msra.mxu0 0.0
    %83 = vmatprep.subr.mxu0 0.0
    %84 = vmatpush1.msra.mxu0 0.0
    %85 = vmatprep.subr.mxu0 0.0
    %86 = vmatpush1.msra.mxu0 0.0
    %87 = vmatprep.subr.mxu0 0.0
    %88 = vmatpush1.msra.mxu0 0.0
    %89 = vmatprep.subr.mxu0 0.0
    %90 = vmatpush1.msra.mxu0 0.0
    %91 = vmatprep.subr.mxu0 0.0
    %92 = vmatpush1.msra.mxu0 0.0
    %93 = vmatprep.subr.mxu0 0.0
    %94 = vmatpush1.msra.mxu0 0.0
    %95 = vmatprep.subr.mxu0 0.0
    %96 = vmatpush1.msra.mxu0 0.0
    %97 = vmatprep.subr.mxu0 0.0
    %98 = vmatpush1.msra.mxu0 0.0
    %99 = vmatprep.subr.mxu0 0.0
    %100 = vmatpush1.msra.mxu0 0.0
    %101 = vmatprep.subr.mxu0 0.0
    %102 = vmatpush1.msra.mxu0 0.0
    %103 = vmatprep.subr.mxu0 0.0
    %104 = vmatpush1.msra.mxu0 0.0
    %105 = vmatprep.mubr.f32.mxu0 0.0
    %106 = vmatmul.mubr.f32.gmra.mrb[0].mxu0 %v36
    %v107 = vpop.f32.mrb[0].mxu0
    %v108 = vadd.f32 %v32, %v107
    %v109 = vpop.f32.mrb[0].mxu0
    %110 = vmatprep.mubr.f32.mxu0 0.0
    %111 = vmatmul.mubr.f32.gmra.mrb[0].mxu0 %v39
    %v112 = vpop.f32.mrb[0].mxu0
    %v113 = vadd.f32 %v32, %v112
    %v114 = vpop.f32.mrb[0].mxu0
    %115 = vdwg.mxu0
    %v116 = vmul.f32 %v108, 0.5
    %v117 = vmul.f32 %v113, 0.5
    %v118 = vmul.f32 %v108, 0.70710677
    %v119 = vmul.f32 %v113, 0.70710677
    %v120 = verf.f32.pop %v118
    %v121 = verf.f32.pop %v119
    %v122 = vadd.f32 %v120, 1.0
    %v123 = vadd.f32 %v121, 1.0
    %v124 = vmul.f32 %v116, %v122
    %v125 = vmul.f32 %v117, %v123
    %v126 = vld [vmem:[%s3] sm:$0xff]
    %v127 = vld [vmem:[%s3 + $0x8] sm:$0xff]
    %v128 = vld [vmem:[%s3 + $0x10] sm:$0xff]
    %v129 = vld [vmem:[%s3 + $0x18] sm:$0xff]
    %v130 = vld [vmem:[%s3 + $0x20] sm:$0xff]
    %v131 = vld [vmem:[%s3 + $0x28] sm:$0xff]
    %v132 = vld [vmem:[%s3 + $0x30] sm:$0xff]
    %v133 = vld [vmem:[%s3 + $0x38] sm:$0xff]
    %v134 = vld [vmem:[%s3 + $0x40] sm:$0xff]
    %v135 = vld [vmem:[%s3 + $0x48] sm:$0xff]
    %v136 = vld [vmem:[%s3 + $0x50] sm:$0xff]
    %v137 = vld [vmem:[%s3 + $0x58] sm:$0xff]
    %v138 = vld [vmem:[%s3 + $0x60] sm:$0xff]
    %v139 = vld [vmem:[%s3 + $0x68] sm:$0xff]
    %v140 = vld [vmem:[%s3 + $0x70] sm:$0xff]
    %v141 = vld [vmem:[%s3 + $0x78] sm:$0xff]
    %v142 = vld [vmem:[%s4] sm:$0x1]
    %v144 = vlaneseq
    %v145 = vshrl.u32 %v144, 7
    %v146 = vsub.s32 0, %v145
    %v147 = vrot.slane %v142, %v146
    %149 = vmatprep.subr.mxu0 0.0
    %150 = vmatpush1.msra.mxu0 %v126
    %151 = vmatprep.subr.mxu0 0.0
    %152 = vmatpush1.msra.mxu0 %v127
    %153 = vmatprep.subr.mxu0 0.0
    %154 = vmatpush1.msra.mxu0 %v128
    %155 = vmatprep.subr.mxu0 0.0
    %156 = vmatpush1.msra.mxu0 %v129
    %157 = vmatprep.subr.mxu0 0.0
    %158 = vmatpush1.msra.mxu0 %v130
    %159 = vmatprep.subr.mxu0 0.0
    %160 = vmatpush1.msra.mxu0 %v131
    %161 = vmatprep.subr.mxu0 0.0
    %162 = vmatpush1.msra.mxu0 %v132
    %163 = vmatprep.subr.mxu0 0.0
    %164 = vmatpush1.msra.mxu0 %v133
    %165 = vmatprep.subr.mxu0 0.0
    %166 = vmatpush1.msra.mxu0 %v134
    %167 = vmatprep.subr.mxu0 0.0
    %168 = vmatpush1.msra.mxu0 %v135
    %169 = vmatprep.subr.mxu0 0.0
    %170 = vmatpush1.msra.mxu0 %v136
    %171 = vmatprep.subr.mxu0 0.0
    %172 = vmatpush1.msra.mxu0 %v137
    %173 = vmatprep.subr.mxu0 0.0
    %174 = vmatpush1.msra.mxu0 %v138
    %175 = vmatprep.subr.mxu0 0.0
    %176 = vmatpush1.msra.mxu0 %v139
    %177 = vmatprep.subr.mxu0 0.0
    %178 = vmatpush1.msra.mxu0 %v140
    %179 = vmatprep.subr.mxu0 0.0
    %180 = vmatpush1.msra.mxu0 %v141
    %181 = vmatprep.subr.mxu0 0.0
    %182 = vmatpush1.msra.mxu0 0.0
    %183 = vmatprep.subr.mxu0 0.0
    %184 = vmatpush1.msra.mxu0 0.0
    %185 = vmatprep.subr.mxu0 0.0
    %186 = vmatpush1.msra.mxu0 0.0
    %187 = vmatprep.subr.mxu0 0.0
    %188 = vmatpush1.msra.mxu0 0.0
    %189 = vmatprep.subr.mxu0 0.0
    %190 = vmatpush1.msra.mxu0 0.0
    %191 = vmatprep.subr.mxu0 0.0
    %192 = vmatpush1.msra.mxu0 0.0
    %193 = vmatprep.subr.mxu0 0.0
    %194 = vmatpush1.msra.mxu0 0.0
    %195 = vmatprep.subr.mxu0 0.0
    %196 = vmatpush1.msra.mxu0 0.0
    %197 = vmatprep.subr.mxu0 0.0
    %198 = vmatpush1.msra.mxu0 0.0
    %199 = vmatprep.subr.mxu0 0.0
    %200 = vmatpush1.msra.mxu0 0.0
    %201 = vmatprep.subr.mxu0 0.0
    %202 = vmatpush1.msra.mxu0 0.0
    %203 = vmatprep.subr.mxu0 0.0
    %204 = vmatpush1.msra.mxu0 0.0
    %205 = vmatprep.subr.mxu0 0.0
    %206 = vmatpush1.msra.mxu0 0.0
    %207 = vmatprep.subr.mxu0 0.0
    %208 = vmatpush1.msra.mxu0 0.0
    %209 = vmatprep.subr.mxu0 0.0
    %210 = vmatpush1.msra.mxu0 0.0
    %211 = vmatprep.subr.mxu0 0.0
    %212 = vmatpush1.msra.mxu0 0.0
    %213 = vmatprep.mubr.f32.mxu0 0.0
    %214 = vmatmul.mubr.f32.gmra.mrb[0].mxu0 %v124
    %v215 = vpop.f32.mrb[0].mxu0
    %v216 = vadd.f32 %v147, %v215
    %v217 = vpop.f32.mrb[0].mxu0
    %218 = vmatprep.mubr.f32.mxu0 0.0
    %219 = vmatmul.mubr.f32.gmra.mrb[0].mxu0 %v125
    %v220 = vpop.f32.mrb[0].mxu0
    %v221 = vadd.f32 %v147, %v220
    %v222 = vpop.f32.mrb[0].mxu0
    %223 = vdwg.mxu0
    %224 = vst.msk [vmem:[#allocation2] sm:$0xff] %vm34, %v216
    %225 = vst.msk [vmem:[#allocation2 + $0x8] sm:$0xff] %vm34, %v221
    // Predicated region
    $region22: #{tpu_custom_call.1} parent=1 // pred_check
      _
    $region23: #{tpu_custom_call.1} parent=1 // pred_check_branch
      %227 = sbr.rel (0) target = $region25
    $region24: #{tpu_custom_call.1} parent=1 // pred_region
      %s229 = ssub.s32 256, 256
      %230 = vsyncadd [#allocation3], %s229
      %s231 = sshll.u32 [#allocation2], 4
      %s232 = int_to_ptr.vmem [resolvable:$true] %s231
      %237 = dma.vmem_to_hbm [thread:$0]  %s232, 256, %s5, [#allocation3], 128, 128, 8
    $region25: #{tpu_custom_call.1} parent=1 // pred_fallthru
      _
    // Predicated region
    $region26: #{tpu_custom_call.1} parent=1 // pred_check
      _
    $region27: #{tpu_custom_call.1} parent=1 // pred_check_branch
      %239 = sbr.rel (0) target = $region29
    $region28: #{tpu_custom_call.1} parent=1 // pred_region
      %240 = dma.done [#allocation3], 256
    $region29: #{tpu_custom_call.1} parent=1 // pred_fallthru
      _
    %241 = vsyncpa [#allocation3], 1

</llo_original>
